<compile_context>
chip_gen: v7x
topology: tpu7x:2x2x1
jax: 0.10.0
libtpu: 0.0.40
codegen_flags: <defaults>
</compile_context>

<pallas_src>
import jax
import jax.numpy as jnp
from jax.experimental import pallas as pl
from jax.experimental.pallas import tpu as pltpu


def _make_asp_kernel(t_valid: int, t_pad: int, eup_bf16: bool):
    def kernel(x_ref, w1_ref, b1_ref, w2_ref, b2_ref, out_ref):
        TB = x_ref.shape[0]
        D = x_ref.shape[2]

        x3 = x_ref[...]                              # (TB, Tp, D), f32 or bf16
        x3f = x3.astype(jnp.float32)                 # stats path stays f32
        x2 = x3.reshape(TB * t_pad, D)               # free view: Tp is sublane-aligned

        # attention = Linear(D, H) -> Tanh : ONE MXU matmul over the folded batch,
        # f32 accumulation regardless of operand dtype.
        pre = jnp.dot(x2, w1_ref[...], preferred_element_type=jnp.float32) + b1_ref[...]
        if eup_bf16:
            # bf16 EUP tanh (v6e/v7x): ~2x transcendental rate; everything after is f32.
            h = jnp.tanh(pre.astype(jnp.bfloat16)).astype(jnp.float32)
        else:
            h = jnp.tanh(pre)                        # (TB*Tp, H) f32

        # Linear(H, 1): VPU multiply + lane reduce instead of an N=1 MXU matmul.
        scores = jnp.sum(h * w2_ref[...], axis=-1, keepdims=True) + b2_ref[0, 0]
        scores = scores.reshape(TB, t_pad, 1)        # (TB, Tp, 1)

        if t_valid < t_pad:
            # Mask padded time steps out of the softmax (static condition at trace time).
            t_idx = jax.lax.broadcasted_iota(jnp.int32, (TB, t_pad, 1), 1)
            scores = jnp.where(t_idx < t_valid, scores, -1e30)

        # softmax over time (dim=1 of the original (B, T, 1) tensor); exact divide for
        # parity with the PyTorch module (denominator is a tiny (TB,1,1) tensor).
        scores = scores - jnp.max(scores, axis=1, keepdims=True)
        e = jnp.exp(scores)
        attn = e / jnp.sum(e, axis=1, keepdims=True)

        # TODO(synk): for real audio-length T, relayout scores lane-dense (TB, T) before
        # the softmax and fold 4 time steps into lanes ((TB, T/4, 4D=128) view +
        # pltpu.roll-reduce) for the statistics path; irrelevant at these small shapes.

        # attention-weighted statistics over time (two-pass variance: numerically safer).
        mean = jnp.sum(attn * x3f, axis=1)                                # (TB, D)
        var = jnp.sum(attn * (x3f - mean[:, None, :]) ** 2, axis=1)       # (TB, D)
        std = jnp.sqrt(var + 1e-12)                                       # (TB, D)

        # two static sub-slice stores into the lane-dense (TB, 1, 2D) output slab
        out_ref[:, :, :D] = mean[:, None, :]
        out_ref[:, :, D:] = std[:, None, :]

    return kernel


def _pick_batch_tile(B, T_pad, D, H, x_itemsize, vmem_budget_bytes):
    """Pick TB so the per-block working set fits the budget AND the grid has >=2 steps."""
    per_row = (2 * T_pad * D * x_itemsize      # double-buffered x block
               + 4 * T_pad * H * 4             # (T,H) f32 matmul/tanh/score temporaries
               + 4 * 2 * D * 4)                # output + per-row stats temporaries
    cap = max(1, vmem_budget_bytes // per_row)
    divs = [d for d in range(1, B + 1) if B % d == 0 and d <= cap]
    if not divs:
        return 1
    # Prefer >=4 grid steps (keeps the DMA pipeline full and gives each v7x TC >=2 steps),
    # fall back to >=2, otherwise take the largest tile that fits.
    for steps in (4, 2):
        fit = [d for d in divs if B // d >= steps]
        if fit:
            return max(fit)
    return max(divs)


def attentive_statistics_pooling(x, w1, b1, w2, b2, *, batch_tile=None,
                                 cast_x_bf16=False, eup_bf16=False, x_buffers=None):
    """x: (B, T, D) f32; w1: (D, H); b1: (H,); w2: (H, 1); b2: (1,) -> (B, 2D) f32.

    cast_x_bf16: ship x (and W1) to the kernel as bf16 (halves HBM bytes; v5e/v6e win).
    eup_bf16:    run the tanh in bf16 (v6e/v7x EUP); keep False on v5e.
    x_buffers:   optional pipeline depth for the x BlockSpec (pl.Buffered(N)).
    """
    B, T, D = x.shape
    H = w1.shape[1]

    x_dtype = jnp.bfloat16 if cast_x_bf16 else x.dtype
    sublane_pack = 16 if x_dtype == jnp.bfloat16 else 8
    T_pad = ((T + sublane_pack - 1) // sublane_pack) * sublane_pack
    if T_pad != T:
        x = jnp.pad(x, ((0, 0), (0, T_pad - T), (0, 0)))
    x = x.astype(x_dtype)
    w1_in = w1.astype(jnp.bfloat16) if cast_x_bf16 else w1

    itemsize = jnp.dtype(x_dtype).itemsize
    VMEM_TILE_BUDGET = 24 * 1024 * 1024        # conservative across v5e/v6e/v7x
    TB = (batch_tile if batch_tile is not None
          else _pick_batch_tile(B, T_pad, D, H, itemsize, VMEM_TILE_BUDGET))
    assert B % TB == 0, "batch_tile must divide batch"

    # Explicit scoped-VMEM limit: cover the estimated working set with headroom, stay
    # within v7x's 64 MiB physical VMEM, never below the per-chip defaults.
    est_vmem = (TB * (2 * T_pad * D * itemsize + 4 * T_pad * H * 4)
                + (D * H) * itemsize + 2 * H * 4 + 4 * TB * 2 * D * 4)
    vmem_limit = int(min(48 * 1024 * 1024, max(32 * 1024 * 1024, 2 * est_vmem)))

    b1_2d = b1.reshape(1, H).astype(jnp.float32)
    w2_row = w2.reshape(1, H).astype(jnp.float32)   # (H,1) -> (1,H) broadcast row (VPU reduce)
    b2_2d = b2.reshape(1, 1).astype(jnp.float32)    # scalar, lives in SMEM

    x_spec_kwargs = {}
    if x_buffers is not None and x_buffers != 2:
        x_spec_kwargs["pipeline_mode"] = pl.Buffered(x_buffers)
    x_spec = pl.BlockSpec((TB, T_pad, D), lambda b: (b, 0, 0), **x_spec_kwargs)

    flops = 2 * B * T_pad * D * H + 2 * B * T_pad * H + 8 * B * T_pad * D
    transcendentals = B * T_pad * H + B * T_pad + B * D        # tanh, exp, sqrt
    bytes_accessed = (x.size * itemsize
                      + w1.size * (2 if cast_x_bf16 else 4)
                      + 4 * (b1.size + w2.size + b2.size + B * 2 * D))

    out3 = pl.pallas_call(
        _make_asp_kernel(T, T_pad, eup_bf16),
        out_shape=jax.ShapeDtypeStruct((B, 1, 2 * D), jnp.float32),
        grid_spec=pltpu.PrefetchScalarGridSpec(
            num_scalar_prefetch=0,
            grid=(B // TB,),
            in_specs=[
                x_spec,                                               # x batch tile
                pl.BlockSpec((D, H), lambda b: (0, 0)),               # W1 (resident)
                pl.BlockSpec((1, H), lambda b: (0, 0)),               # b1
                pl.BlockSpec((1, H), lambda b: (0, 0)),               # W2 as a row
                pl.BlockSpec(memory_space=pltpu.MemorySpace.SMEM),    # b2 scalar
            ],
            out_specs=pl.BlockSpec((TB, 1, 2 * D), lambda b: (b, 0, 0)),
        ),
        compiler_params=pltpu.CompilerParams(
            dimension_semantics=("parallel",),        # shards batch steps across v7x TCs
            vmem_limit_bytes=vmem_limit,
        ),
        cost_estimate=pl.CostEstimate(
            flops=flops,
            transcendentals=transcendentals,
            bytes_accessed=bytes_accessed,
        ),
    )(x, w1_in, b1_2d, w2_row, b2_2d)

    return out3.reshape(B, 2 * D)


def _reference(x, w1, b1, w2, b2):
    # Pure-JAX reference mirroring the PyTorch forward.
    scores = jnp.tanh(x @ w1 + b1) @ w2 + b2           # (B, T, 1)
    attn = jax.nn.softmax(scores, axis=1)
    mean = jnp.sum(attn * x, axis=1)                   # (B, D)
    var = jnp.sum(attn * (x - mean[:, None, :]) ** 2, axis=1)
    std = jnp.sqrt(var + 1e-12)
    return jnp.concatenate([mean, std], axis=1)


if __name__ == "__main__":
    B, T, D, H = 2, 8, 32, 128   # input_dim=32, hidden_dim=128 (module default)

    key = jax.random.PRNGKey(0)
    kx, k1, k2, k3, k4 = jax.random.split(key, 5)

    x = jax.random.normal(kx, (B, T, D), dtype=jnp.float32)
    # Deterministic synthetic parameters (shapes from nn.Linear(D,H), nn.Linear(H,1)).
    w1 = jax.random.normal(k1, (D, H), dtype=jnp.float32) * 0.1
    b1 = jax.random.normal(k2, (H,), dtype=jnp.float32) * 0.1
    w2 = jax.random.normal(k3, (H, 1), dtype=jnp.float32) * 0.1
    b2 = jax.random.normal(k4, (1,), dtype=jnp.float32) * 0.1

    ref = _reference(x, w1, b1, w2, b2)

    # Default f32 path. Auto-tiler picks TB=1 here -> grid=(2,), exercising multi-step
    # pipelining and leading-dim blocking. Tolerance absorbs MXU default-precision
    # differences between the XLA reference matmul and the Mosaic in-kernel matmul.
    out = jax.block_until_ready(attentive_statistics_pooling(x, w1, b1, w2, b2))
    assert out.shape == (B, 2 * D)
    assert jnp.allclose(out, ref, atol=1e-2, rtol=1e-2), "f32 path mismatch vs reference"

    # "Fast" path: bf16 x/W1 at the HBM boundary (mem-bound v5e/v6e win) + bf16 tanh
    # (v6e/v7x EUP win). Also exercises the padded-time masking (T=8 -> T_pad=16 for
    # bf16 x). Correct on v5e too, just slower there. Looser tolerance reflects bf16
    # inputs feeding an exponentially-sensitive softmax.
    out_fast = jax.block_until_ready(
        attentive_statistics_pooling(x, w1, b1, w2, b2, cast_x_bf16=True, eup_bf16=True)
    )
    assert jnp.allclose(out_fast, ref, atol=8e-2, rtol=8e-2), "bf16 path mismatch vs reference"

    print("KERNEL_OK")
</pallas_src>

<mosaic_0001>
module attributes {stable_mosaic.version = 11 : i64} {
  func.func @kernel(%arg0: i32, %arg1: memref<1x8x32xf32, #tpu.memory_space<vmem>>, %arg2: memref<32x128xf32, #tpu.memory_space<vmem>>, %arg3: memref<1x128xf32, #tpu.memory_space<vmem>>, %arg4: memref<1x128xf32, #tpu.memory_space<vmem>>, %arg5: memref<1x1xf32, #tpu.memory_space<smem>>, %arg6: memref<1x1x64xf32, #tpu.memory_space<vmem>>) attributes {dimension_semantics = [#tpu.dimension_semantics<parallel>], iteration_bounds = array<i64: 2>, scalar_prefetch = 0 : i64, scratch_operands = 0 : i64, tpu.core_type = #tpu.core_type<tc>, window_params = [{transform_indices = @transform_0, window_bounds = array<i64: 1, 8, 32>}, {pipeline_mode = #tpu.pipeline_mode<synchronous>, transform_indices = @transform_1, window_bounds = array<i64: 32, 128>}, {pipeline_mode = #tpu.pipeline_mode<synchronous>, transform_indices = @transform_2, window_bounds = array<i64: 1, 128>}, {pipeline_mode = #tpu.pipeline_mode<synchronous>, transform_indices = @transform_3, window_bounds = array<i64: 1, 128>}, {transform_indices = @transform_4, window_bounds = array<i64: 1, 1>}, {transform_indices = @transform_5, window_bounds = array<i64: 1, 1, 64>}]} {
    %c0 = arith.constant 0 : index
    %c0_0 = arith.constant 0 : index
    %c0_1 = arith.constant 0 : index
    %0 = vector.load %arg1[%c0, %c0_0, %c0_1] : memref<1x8x32xf32, #tpu.memory_space<vmem>>, vector<1x8x32xf32>
    %1 = vector.shape_cast %0 : vector<1x8x32xf32> to vector<8x32xf32>
    %c0_2 = arith.constant 0 : index
    %c0_3 = arith.constant 0 : index
    %2 = vector.load %arg2[%c0_2, %c0_3] : memref<32x128xf32, #tpu.memory_space<vmem>>, vector<32x128xf32>
    %cst = arith.constant dense<0.000000e+00> : vector<8x128xf32>
    %3 = tpu.matmul %1, %2, %cst {dimension_numbers = #tpu.dot_dimension_numbers<[1], [0], [0], [1], [0, 0, 1, 1], [], []>} : vector<8x32xf32>, vector<32x128xf32>, vector<8x128xf32> -> vector<8x128xf32>
    %c0_4 = arith.constant 0 : index
    %c0_5 = arith.constant 0 : index
    %4 = vector.load %arg3[%c0_4, %c0_5] : memref<1x128xf32, #tpu.memory_space<vmem>>, vector<1x128xf32>
    %5 = vector.broadcast %4 : vector<1x128xf32> to vector<8x128xf32>
    %6 = arith.addf %3, %5 : vector<8x128xf32>
    %7 = math.tanh %6 : vector<8x128xf32>
    %c0_6 = arith.constant 0 : index
    %c0_7 = arith.constant 0 : index
    %8 = vector.load %arg4[%c0_6, %c0_7] : memref<1x128xf32, #tpu.memory_space<vmem>>, vector<1x128xf32>
    %9 = vector.broadcast %8 : vector<1x128xf32> to vector<8x128xf32>
    %10 = arith.mulf %7, %9 : vector<8x128xf32>
    %cst_8 = arith.constant dense<0.000000e+00> : vector<8xf32>
    %11 = vector.multi_reduction <add>, %10, %cst_8 [1] : vector<8x128xf32> to vector<8xf32>
    %12 = vector.shape_cast %11 : vector<8xf32> to vector<8x1xf32>
    %c0_9 = arith.constant 0 : index
    %c0_10 = arith.constant 0 : index
    %13 = memref.load %arg5[%c0_9, %c0_10] : memref<1x1xf32, #tpu.memory_space<smem>>
    %14 = vector.broadcast %13 : f32 to vector<8x1xf32>
    %15 = arith.addf %12, %14 : vector<8x1xf32>
    %16 = vector.shape_cast %15 : vector<8x1xf32> to vector<1x8x1xf32>
    %cst_11 = arith.constant dense<0xFF800000> : vector<1x1xf32>
    %17 = vector.multi_reduction <maximumf>, %16, %cst_11 [1] : vector<1x8x1xf32> to vector<1x1xf32>
    %18 = vector.shape_cast %17 : vector<1x1xf32> to vector<1x1x1xf32>
    %19 = vector.broadcast %18 : vector<1x1x1xf32> to vector<1x8x1xf32>
    %20 = arith.subf %16, %19 : vector<1x8x1xf32>
    %21 = math.exp %20 : vector<1x8x1xf32>
    %cst_12 = arith.constant dense<0.000000e+00> : vector<1x1xf32>
    %22 = vector.multi_reduction <add>, %21, %cst_12 [1] : vector<1x8x1xf32> to vector<1x1xf32>
    %23 = vector.shape_cast %22 : vector<1x1xf32> to vector<1x1x1xf32>
    %24 = vector.broadcast %23 : vector<1x1x1xf32> to vector<1x8x1xf32>
    %25 = arith.divf %21, %24 : vector<1x8x1xf32>
    %26 = vector.broadcast %25 : vector<1x8x1xf32> to vector<1x8x32xf32>
    %27 = arith.mulf %26, %0 : vector<1x8x32xf32>
    %cst_13 = arith.constant dense<0.000000e+00> : vector<1x32xf32>
    %28 = vector.multi_reduction <add>, %27, %cst_13 [1] : vector<1x8x32xf32> to vector<1x32xf32>
    %29 = vector.shape_cast %28 : vector<1x32xf32> to vector<1x1x32xf32>
    %30 = vector.broadcast %29 : vector<1x1x32xf32> to vector<1x8x32xf32>
    %31 = arith.subf %0, %30 : vector<1x8x32xf32>
    %32 = arith.mulf %31, %31 : vector<1x8x32xf32>
    %33 = vector.broadcast %25 : vector<1x8x1xf32> to vector<1x8x32xf32>
    %34 = arith.mulf %33, %32 : vector<1x8x32xf32>
    %cst_14 = arith.constant dense<0.000000e+00> : vector<1x32xf32>
    %35 = vector.multi_reduction <add>, %34, %cst_14 [1] : vector<1x8x32xf32> to vector<1x32xf32>
    %cst_15 = arith.constant 9.99999996E-13 : f32
    %36 = vector.broadcast %cst_15 : f32 to vector<1x32xf32>
    %37 = arith.addf %35, %36 : vector<1x32xf32>
    %38 = math.sqrt %37 : vector<1x32xf32>
    %39 = vector.shape_cast %28 : vector<1x32xf32> to vector<1x1x32xf32>
    %c0_16 = arith.constant 0 : index
    %c0_17 = arith.constant 0 : index
    %c0_18 = arith.constant 0 : index
    %40 = vector.load %arg6[%c0_16, %c0_17, %c0_18] : memref<1x1x64xf32, #tpu.memory_space<vmem>>, vector<1x1x32xf32>
    tpu.vector_store %arg6[%c0_16, %c0_17, %c0_18], %39 {strides = array<i32>} : memref<1x1x64xf32, #tpu.memory_space<vmem>>, vector<1x1x32xf32>,
    %41 = vector.shape_cast %38 : vector<1x32xf32> to vector<1x1x32xf32>
    %c0_19 = arith.constant 0 : index
    %c0_20 = arith.constant 0 : index
    %c32 = arith.constant 32 : index
    %42 = vector.load %arg6[%c0_19, %c0_20, %c32] : memref<1x1x64xf32, #tpu.memory_space<vmem>>, vector<1x1x32xf32>
    tpu.vector_store %arg6[%c0_19, %c0_20, %c32], %41 {strides = array<i32>} : memref<1x1x64xf32, #tpu.memory_space<vmem>>, vector<1x1x32xf32>,
    return
  }
  func.func @transform_0(%arg0: i32) -> (i32, i32, i32) {
    %c0_i32 = arith.constant 0 : i32
    %c0_i32_0 = arith.constant 0 : i32
    %c0_i32_1 = arith.constant 0 : i32
    return %arg0, %c0_i32, %c0_i32_0 : i32, i32, i32
  }
  func.func @transform_1(%arg0: i32) -> (i32, i32) {
    %c0_i32 = arith.constant 0 : i32
    %c0_i32_0 = arith.constant 0 : i32
    %c0_i32_1 = arith.constant 0 : i32
    return %c0_i32, %c0_i32_0 : i32, i32
  }
  func.func @transform_2(%arg0: i32) -> (i32, i32) {
    %c0_i32 = arith.constant 0 : i32
    %c0_i32_0 = arith.constant 0 : i32
    %c0_i32_1 = arith.constant 0 : i32
    return %c0_i32, %c0_i32_0 : i32, i32
  }
  func.func @transform_3(%arg0: i32) -> (i32, i32) {
    %c0_i32 = arith.constant 0 : i32
    %c0_i32_0 = arith.constant 0 : i32
    %c0_i32_1 = arith.constant 0 : i32
    return %c0_i32, %c0_i32_0 : i32, i32
  }
  func.func @transform_4(%arg0: i32) -> (i32, i32) {
    %c0_i32 = arith.constant 0 : i32
    %c0_i32_0 = arith.constant 0 : i32
    %c0_i32_1 = arith.constant 0 : i32
    return %c0_i32, %c0_i32_0 : i32, i32
  }
  func.func @transform_5(%arg0: i32) -> (i32, i32, i32) {
    %c0_i32 = arith.constant 0 : i32
    %c0_i32_0 = arith.constant 0 : i32
    %c0_i32_1 = arith.constant 0 : i32
    return %arg0, %c0_i32, %c0_i32_0 : i32, i32, i32
  }
}

</mosaic_0001>

<llo_original>
// kernel: tpu_custom_call.1
$region0: #{tpu_custom_call.1}
  #allocation0 [shape = 'u32[]', space=smem, size = 0x4, offset = 0x4, fixed_abs, tag = 'smem constant byte address 0x4 - core index']
  #allocation1 [shape = 'u32[144,128]{1,0:T(1,128)}', space=vmem, size = 0x12000, scoped, tag = 'internal scratch']
  #allocation2 [shape = 'f32[1,1]{1,0:T(1,128)S(6)}', space=smem, size = 0x200, scoped, tag = 'scoped memory for tpu_custom_call.1']
  %s0 = inlined_call_operand.hbm [shape: f32[2,8,32], index: 0, kind: input, shape index: {}]
  %s1 = inlined_call_operand.hbm [shape: f32[32,128], index: 1, kind: input, shape index: {}]
  %s2 = inlined_call_operand.vmem [shape: f32[1,128], index: 2, kind: input, shape index: {}]
  %s3 = inlined_call_operand.vmem [shape: f32[1,128], index: 3, kind: input, shape index: {}]
  %s4 = inlined_call_operand.<no memory space> [shape: f32[1,1], index: 4, kind: input, shape index: {}]
  %s5 = inlined_call_operand.hbm [shape: f32[2,1,64], index: 5, kind: output, shape index: {}]
  %s6 = sld [smem:[#allocation0]]
  $region61: #{tpu_custom_call.1} parent=0
    _
  %s8 = ssub.s32 1, %s6
  %s9 = scalar_select 0, %s8, %s6
  %10 = sst [smem:[#allocation2]] %s4
  $region1: #{tpu_custom_call.1} parent=0
    #allocation3 [shape = 'u8[8192]{0}', space=vmem, size = 0x2000, scoped, tag = 'input window, operand 0']
    #allocation4 [shape = 's32[2]{0}', space=sflag, size = 0x8, scoped, tag = 'scoped memory for tpu_custom_call.1']
    #allocation5 [shape = 's32[2]{0}', space=sflag, size = 0x8, scoped, tag = 'scoped memory for tpu_custom_call.1']
    #allocation6 [shape = 'u8[16384]{0}', space=vmem, size = 0x4000, scoped, tag = 'input window, operand 1, single buffered']
    #allocation7 [shape = 's32[1]{0}', space=sflag, size = 0x4, scoped, tag = 'scoped memory for tpu_custom_call.1']
    #allocation8 [shape = 'u8[1024]{0}', space=vmem, size = 0x400, scoped, tag = 'output window, operand 0']
    %11 = vsyncpa [#allocation4], 0
    %s12 = scalar_lea.sflag [#allocation4], 1
    %13 = vsyncpa %s12, 0
    %14 = vsyncpa [#allocation7], 0
    %15 = vsyncpa [#allocation5], 0
    %s16 = scalar_lea.sflag [#allocation5], 1
    %17 = vsyncpa %s16, 0
    loop: start=0, step=1, limit=4
    $region2: #{tpu_custom_call.1} parent=1 // loop_pre_header
      _
    $region3: #{tpu_custom_call.1} parent=1 // loop_header
      %s19 = sphi 0, %s23
      %p20 = scmp.ge.s32.totalorder %s19, 4
      %s29 = sphi 0, %s31
      %s32 = sphi 0, %s29
      %s33 = sphi 0, %s32
      %s49 = sphi 0, %s33
      %s53 = sphi 0, %s53
      %s55 = sphi 0, %s53
      %s56 = sphi 0, %s55
      %s70 = sphi 0, %s56
      %s74 = sphi 0, %s74
      %s76 = sphi 0, %s74
      %s77 = sphi 0, %s76
      %s91 = sphi 0, %s77
      %s95 = sphi 0, %s95
      %s97 = sphi 0, %s95
      %s98 = sphi 0, %s97
      %s112 = sphi 0, %s98
      %s116 = sphi 0, %s116
      %s118 = sphi 0, %s116
      %s119 = sphi 0, %s118
      %s133 = sphi 0, %s119
      %s139 = sphi 0, %s141
      %s142 = sphi 0, %s139
      %s143 = sphi 0, %s142
      %s159 = sphi 0, %s143
    $region4: #{tpu_custom_call.1} parent=1 // loop_header_branch
      %22 = sbr.rel (%p20) target = $region8
    $region5: #{tpu_custom_call.1} parent=1 // loop_body
      %s24 = ssub.s32 %s19, 1
      %s25 = ssub.s32 %s19, 2
      %s26 = sadd.s32 %s19, 1
      %s27 = ssub.s32 %s19, %s26
      %p28 = scmp.eq.s32.totalorder %s27, 0
      %s30 = sadd.s32 %s29, 1
      %s31 = scalar_select %p28, %s29, %s30
      %p34 = pneg %p28
      %p35 = scmp.eq.s32.totalorder %s19, 1
      %p36 = por %p34, %p35
      %p37 = scmp.ne.s32.totalorder %s29, %s32
      %p38 = scmp.eq.s32.totalorder %s19, 0
      %p39 = por %p37, %p38
      %p40 = scmp.ne.s32.totalorder %s29, %s32
      %p41 = scmp.eq.s32.totalorder %s24, 1
      %p42 = por %p40, %p41
      %p43 = scmp.ne.s32.totalorder %s32, %s33
      %p44 = scmp.eq.s32.totalorder %s24, 0
      %p45 = por %p43, %p44
      %p46 = scmp.ne.s32.totalorder %s32, %s33
      %p47 = scmp.eq.s32.totalorder %s25, 1
      %p48 = por %p46, %p47
      %p50 = scmp.ne.s32.totalorder %s33, %s49
      %p51 = scmp.eq.s32.totalorder %s25, 0
      %p52 = por %p50, %p51
      %s54 = sadd.s32 %s53, 1
      %p57 = scmp.eq.s32.totalorder %s19, 1
      %p58 = scmp.ne.s32.totalorder %s53, %s55
      %p59 = scmp.eq.s32.totalorder %s19, 0
      %p60 = por %p58, %p59
      %p61 = scmp.ne.s32.totalorder %s53, %s55
      %p62 = scmp.eq.s32.totalorder %s24, 1
      %p63 = por %p61, %p62
      %p64 = scmp.ne.s32.totalorder %s55, %s56
      %p65 = scmp.eq.s32.totalorder %s24, 0
      %p66 = por %p64, %p65
      %p67 = scmp.ne.s32.totalorder %s55, %s56
      %p68 = scmp.eq.s32.totalorder %s25, 1
      %p69 = por %p67, %p68
      %p71 = scmp.ne.s32.totalorder %s56, %s70
      %p72 = scmp.eq.s32.totalorder %s25, 0
      %p73 = por %p71, %p72
      %s75 = sadd.s32 %s74, 1
      %p78 = scmp.eq.s32.totalorder %s19, 1
      %p79 = scmp.ne.s32.totalorder %s74, %s76
      %p80 = scmp.eq.s32.totalorder %s19, 0
      %p81 = por %p79, %p80
      %p82 = scmp.ne.s32.totalorder %s74, %s76
      %p83 = scmp.eq.s32.totalorder %s24, 1
      %p84 = por %p82, %p83
      %p85 = scmp.ne.s32.totalorder %s76, %s77
      %p86 = scmp.eq.s32.totalorder %s24, 0
      %p87 = por %p85, %p86
      %p88 = scmp.ne.s32.totalorder %s76, %s77
      %p89 = scmp.eq.s32.totalorder %s25, 1
      %p90 = por %p88, %p89
      %p92 = scmp.ne.s32.totalorder %s77, %s91
      %p93 = scmp.eq.s32.totalorder %s25, 0
      %p94 = por %p92, %p93
      %s96 = sadd.s32 %s95, 1
      %p99 = scmp.eq.s32.totalorder %s19, 1
      %p100 = scmp.ne.s32.totalorder %s95, %s97
      %p101 = scmp.eq.s32.totalorder %s19, 0
      %p102 = por %p100, %p101
      %p103 = scmp.ne.s32.totalorder %s95, %s97
      %p104 = scmp.eq.s32.totalorder %s24, 1
      %p105 = por %p103, %p104
      %p106 = scmp.ne.s32.totalorder %s97, %s98
      %p107 = scmp.eq.s32.totalorder %s24, 0
      %p108 = por %p106, %p107
      %p109 = scmp.ne.s32.totalorder %s97, %s98
      %p110 = scmp.eq.s32.totalorder %s25, 1
      %p111 = por %p109, %p110
      %p113 = scmp.ne.s32.totalorder %s98, %s112
      %p114 = scmp.eq.s32.totalorder %s25, 0
      %p115 = por %p113, %p114
      %s117 = sadd.s32 %s116, 1
      %p120 = scmp.eq.s32.totalorder %s19, 1
      %p121 = scmp.ne.s32.totalorder %s116, %s118
      %p122 = scmp.eq.s32.totalorder %s19, 0
      %p123 = por %p121, %p122
      %p124 = scmp.ne.s32.totalorder %s116, %s118
      %p125 = scmp.eq.s32.totalorder %s24, 1
      %p126 = por %p124, %p125
      %p127 = scmp.ne.s32.totalorder %s118, %s119
      %p128 = scmp.eq.s32.totalorder %s24, 0
      %p129 = por %p127, %p128
      %p130 = scmp.ne.s32.totalorder %s118, %s119
      %p131 = scmp.eq.s32.totalorder %s25, 1
      %p132 = por %p130, %p131
      %p134 = scmp.ne.s32.totalorder %s119, %s133
      %p135 = scmp.eq.s32.totalorder %s25, 0
      %p136 = por %p134, %p135
      %s137 = ssub.s32 %s19, %s26
      %p138 = scmp.eq.s32.totalorder %s137, 0
      %s140 = sadd.s32 %s139, 1
      %s141 = scalar_select %p138, %s139, %s140
      %p144 = pneg %p138
      %p145 = scmp.eq.s32.totalorder %s19, 1
      %p146 = por %p144, %p145
      %p147 = scmp.ne.s32.totalorder %s139, %s142
      %p148 = scmp.eq.s32.totalorder %s19, 0
      %p149 = por %p147, %p148
      %p150 = scmp.ne.s32.totalorder %s139, %s142
      %p151 = scmp.eq.s32.totalorder %s24, 1
      %p152 = por %p150, %p151
      %p153 = scmp.ne.s32.totalorder %s142, %s143
      %p154 = scmp.eq.s32.totalorder %s24, 0
      %p155 = por %p153, %p154
      %p156 = scmp.ne.s32.totalorder %s142, %s143
      %p157 = scmp.eq.s32.totalorder %s25, 1
      %p158 = por %p156, %p157
      %p160 = scmp.ne.s32.totalorder %s143, %s159
      %p161 = scmp.eq.s32.totalorder %s25, 0
      %p162 = por %p160, %p161
      %p163 = scmp.le.s32.totalorder 1, %s19
      %p164 = scmp.lt.s32.totalorder %s19, 3
      %p165 = pnand %p163, %p164
      %p166 = pneg %p165
      // Predicated region
      $region9: #{tpu_custom_call.1} parent=5 // pred_check
        _
      $region10: #{tpu_custom_call.1} parent=5 // pred_check_branch
        %168 = sbr.rel (%p165) target = $region12
      $region11: #{tpu_custom_call.1} parent=5 // pred_region
        %s169 = ssub.s32 %s19, 1
        // Predicated region
        $region13: #{tpu_custom_call.1} parent=11 // pred_check
          %p170 = pneg %p66
        $region14: #{tpu_custom_call.1} parent=11 // pred_check_branch
          %172 = sbr.rel (%p170) target = $region16
        $region15: #{tpu_custom_call.1} parent=11 // pred_region
          %s174 = ssub.s32 512, 512
          %175 = vsyncadd [#allocation7], %s174
          %s176 = sshll.u32 [#allocation6], 4
          %s177 = int_to_ptr.vmem [resolvable:$true] %s176
          %182 = dma.hbm_to_vmem [thread:$0]  %s1, 512, %s177, [#allocation7], 128, 128, 8
        $region16: #{tpu_custom_call.1} parent=11 // pred_fallthru
          _
        // Predicated region
        $region17: #{tpu_custom_call.1} parent=11 // pred_check
          %p183 = pneg %p87
        $region18: #{tpu_custom_call.1} parent=11 // pred_check_branch
          %185 = sbr.rel (%p183) target = $region20
        $region19: #{tpu_custom_call.1} parent=11 // pred_region
          _
        $region20: #{tpu_custom_call.1} parent=11 // pred_fallthru
          _
        // Predicated region
        $region21: #{tpu_custom_call.1} parent=11 // pred_check
          %p186 = pneg %p108
        $region22: #{tpu_custom_call.1} parent=11 // pred_check_branch
          %188 = sbr.rel (%p186) target = $region24
        $region23: #{tpu_custom_call.1} parent=11 // pred_region
          _
        $region24: #{tpu_custom_call.1} parent=11 // pred_fallthru
          _
        // Predicated region
        $region25: #{tpu_custom_call.1} parent=11 // pred_check
          %p189 = pneg %p129
        $region26: #{tpu_custom_call.1} parent=11 // pred_check_branch
          %191 = sbr.rel (%p189) target = $region28
        $region27: #{tpu_custom_call.1} parent=11 // pred_region
          _
        $region28: #{tpu_custom_call.1} parent=11 // pred_fallthru
          _
      $region12: #{tpu_custom_call.1} parent=5 // pred_fallthru
        _
      %p192 = scmp.lt.s32.totalorder %s19, 2
      // Predicated region
      $region29: #{tpu_custom_call.1} parent=5 // pred_check
        %p193 = pneg %p192
      $region30: #{tpu_custom_call.1} parent=5 // pred_check_branch
        %195 = sbr.rel (%p193) target = $region32
      $region31: #{tpu_custom_call.1} parent=5 // pred_region
        // Predicated region
        $region33: #{tpu_custom_call.1} parent=31 // pred_check
          %p196 = pneg %p39
        $region34: #{tpu_custom_call.1} parent=31 // pred_check_branch
          %198 = sbr.rel (%p196) target = $region36
        $region35: #{tpu_custom_call.1} parent=31 // pred_region
          %s199 = sand.u32 %s29, 1
          %s200 = scalar_lea.sflag [#allocation4], %s199
          %s201 = sand.u32 %s29, 1
          %s202 = smul.addr %s201, 8
          %s203 = scalar_lea.vmem [#allocation3], %s202
          %s205 = ssub.s32 128, 128
          %206 = vsyncadd %s200, %s205
          %s207 = smul.addr %s19, 128
          %s208 = scalar_lea.hbm %s0, %s207
          %s210 = sshll.u32 %s203, 4
          %s211 = int_to_ptr.vmem [resolvable:$true] %s210
          %213 = dma.hbm_to_vmem [thread:$0]  %s208, 128, %s211, %s200
        $region36: #{tpu_custom_call.1} parent=31 // pred_fallthru
          _
      $region32: #{tpu_custom_call.1} parent=5 // pred_fallthru
        _
      %p214 = scmp.le.s32.totalorder 1, %s19
      %p215 = scmp.lt.s32.totalorder %s19, 3
      %p216 = pnand %p214, %p215
      %p217 = pneg %p216
      // Predicated region
      $region37: #{tpu_custom_call.1} parent=5 // pred_check
        _
      $region38: #{tpu_custom_call.1} parent=5 // pred_check_branch
        %219 = sbr.rel (%p216) target = $region40
      $region39: #{tpu_custom_call.1} parent=5 // pred_region
        %s220 = ssub.s32 %s19, 1
        %s221 = sand.u32 %s32, 1
        %s222 = scalar_lea.sflag [#allocation4], %s221
        %s223 = sand.u32 %s32, 1
        %s224 = smul.addr %s223, 8
        %s225 = scalar_lea.vmem [#allocation3], %s224
        // Predicated region
        $region41: #{tpu_custom_call.1} parent=39 // pred_check
          %p226 = pneg %p45
        $region42: #{tpu_custom_call.1} parent=39 // pred_check_branch
          %228 = sbr.rel (%p226) target = $region44
        $region43: #{tpu_custom_call.1} parent=39 // pred_region
          %229 = dma.done %s222, 128
        $region44: #{tpu_custom_call.1} parent=39 // pred_fallthru
          _
        // Predicated region
        $region45: #{tpu_custom_call.1} parent=39 // pred_check
          %p230 = pneg %p66
        $region46: #{tpu_custom_call.1} parent=39 // pred_check_branch
          %232 = sbr.rel (%p230) target = $region48
        $region47: #{tpu_custom_call.1} parent=39 // pred_region
          %233 = dma.done [#allocation7], 512
        $region48: #{tpu_custom_call.1} parent=39 // pred_fallthru
          _
        %s234 = sand.u32 %s32, 1
        %s235 = scalar_lea.sflag [#allocation4], %s234
        %s236 = sand.u32 %s32, 1
        %s237 = smul.addr %s236, 8
        %s238 = scalar_lea.vmem [#allocation3], %s237
        %p239 = pneg %p45
        %p240 = pneg %p42
        %p241 = pneg %p66
        %p242 = pneg %p63
        %p243 = pneg %p87
        %p244 = pneg %p84
        %p245 = pneg %p108
        %p246 = pneg %p105
        %p247 = pneg %p129
        %p248 = pneg %p126
        %p249 = pneg %p155
        %p250 = pneg %p152
        %s251 = sand.u32 %s142, 1
        %s252 = scalar_lea.sflag [#allocation5], %s251
        %s253 = sand.u32 %s142, 1
        %s254 = scalar_lea.vmem [#allocation8], %s253
        %v255 = vld [vmem:[%s225] sm:$0xff]
        %v256 = vld [vmem:[#allocation6] sm:$0xff]
        %v257 = vld [vmem:[#allocation6 + $0x8] sm:$0xff]
        %v258 = vld [vmem:[#allocation6 + $0x10] sm:$0xff]
        %v259 = vld [vmem:[#allocation6 + $0x18] sm:$0xff]
        %v260 = vld [vmem:[%s2] sm:$0x1]
        %v262 = vlaneseq
        %v263 = vshrl.u32 %v262, 7
        %v264 = vsub.s32 0, %v263
        %v265 = vrot.slane %v260, %v264
        %vm267 = vcmask 261120
        %v269 = vsel %vm267, %v255, 0
        %271 = vmatprep.subr.mxu0 0.0
        %272 = vmatpush1.msra.mxu0 %v256
        %273 = vmatprep.subr.mxu0 0.0
        %274 = vmatpush1.msra.mxu0 %v257
        %275 = vmatprep.subr.mxu0 0.0
        %276 = vmatpush1.msra.mxu0 %v258
        %277 = vmatprep.subr.mxu0 0.0
        %278 = vmatpush1.msra.mxu0 %v259
        %279 = vmatprep.subr.mxu0 0.0
        %280 = vmatpush1.msra.mxu0 0.0
        %281 = vmatprep.subr.mxu0 0.0
        %282 = vmatpush1.msra.mxu0 0.0
        %283 = vmatprep.subr.mxu0 0.0
        %284 = vmatpush1.msra.mxu0 0.0
        %285 = vmatprep.subr.mxu0 0.0
        %286 = vmatpush1.msra.mxu0 0.0
        %287 = vmatprep.subr.mxu0 0.0
        %288 = vmatpush1.msra.mxu0 0.0
        %289 = vmatprep.subr.mxu0 0.0
        %290 = vmatpush1.msra.mxu0 0.0
        %291 = vmatprep.subr.mxu0 0.0
        %292 = vmatpush1.msra.mxu0 0.0
        %293 = vmatprep.subr.mxu0 0.0
        %294 = vmatpush1.msra.mxu0 0.0
        %295 = vmatprep.subr.mxu0 0.0
        %296 = vmatpush1.msra.mxu0 0.0
        %297 = vmatprep.subr.mxu0 0.0
        %298 = vmatpush1.msra.mxu0 0.0
        %299 = vmatprep.subr.mxu0 0.0
        %300 = vmatpush1.msra.mxu0 0.0
        %301 = vmatprep.subr.mxu0 0.0
        %302 = vmatpush1.msra.mxu0 0.0
        %303 = vmatprep.subr.mxu0 0.0
        %304 = vmatpush1.msra.mxu0 0.0
        %305 = vmatprep.subr.mxu0 0.0
        %306 = vmatpush1.msra.mxu0 0.0
        %307 = vmatprep.subr.mxu0 0.0
        %308 = vmatpush1.msra.mxu0 0.0
        %309 = vmatprep.subr.mxu0 0.0
        %310 = vmatpush1.msra.mxu0 0.0
        %311 = vmatprep.subr.mxu0 0.0
        %312 = vmatpush1.msra.mxu0 0.0
        %313 = vmatprep.subr.mxu0 0.0
        %314 = vmatpush1.msra.mxu0 0.0
        %315 = vmatprep.subr.mxu0 0.0
        %316 = vmatpush1.msra.mxu0 0.0
        %317 = vmatprep.subr.mxu0 0.0
        %318 = vmatpush1.msra.mxu0 0.0
        %319 = vmatprep.subr.mxu0 0.0
        %320 = vmatpush1.msra.mxu0 0.0
        %321 = vmatprep.subr.mxu0 0.0
        %322 = vmatpush1.msra.mxu0 0.0
        %323 = vmatprep.subr.mxu0 0.0
        %324 = vmatpush1.msra.mxu0 0.0
        %325 = vmatprep.subr.mxu0 0.0
        %326 = vmatpush1.msra.mxu0 0.0
        %327 = vmatprep.subr.mxu0 0.0
        %328 = vmatpush1.msra.mxu0 0.0
        %329 = vmatprep.subr.mxu0 0.0
        %330 = vmatpush1.msra.mxu0 0.0
        %331 = vmatprep.subr.mxu0 0.0
        %332 = vmatpush1.msra.mxu0 0.0
        %333 = vmatprep.subr.mxu0 0.0
        %334 = vmatpush1.msra.mxu0 0.0
        %335 = vmatprep.mubr.f32.mxu0 0.0
        %336 = vmatmul.mubr.f32.gmra.mrb[0].mxu0 %v269
        %v337 = vpop.f32.mrb[0].mxu0
        %v338 = vadd.f32 %v265, %v337
        %v339 = vpop.f32.mrb[0].mxu0
        %340 = vdwg.mxu0
        %v341 = vtanh.pop %v338
        %v342 = vld [vmem:[%s3] sm:$0x1]
        %v344 = vlaneseq
        %v345 = vshrl.u32 %v344, 7
        %v346 = vsub.s32 0, %v345
        %v347 = vrot.slane %v342, %v346
        %v349 = vmul.f32 %v341, %v347
        %350 = vadd.xlane.f32.xlu0 %v349
        %v351 = vpop.xlane.xlu0 %350
        %s352 = sld [smem:[#allocation2]]
        %v353 = vstv %s352
        %v354 = vadd.f32 %v351, %v353
        %v355 = vrot.slane %v354, 4
        %v356 = vmax.f32 %v354, %v355
        %v357 = vrot.slane %v356, 2
        %v358 = vmax.f32 %v356, %v357
        %v359 = vrot.slane %v358, 1
        %v360 = vmax.f32 %v358, %v359
        %v361 = vsub.f32 %v354, %v360
        %v362 = vmul.f32 %v361, 1.442695
        %v363 = vpow.pop %v362
        %v364 = vrot.slane %v363, 4
        %v365 = vadd.f32 %v363, %v364
        %v366 = vrot.slane %v365, 2
        %v367 = vadd.f32 %v365, %v366
        %v368 = vrot.slane %v367, 1
        %v369 = vadd.f32 %v367, %v368
        %v370 = vrcp.pop %v369
        %v371 = vmul.f32 %v363, %v370
        %v372 = vmul.f32 %v371, %v255
        %v373 = vsel %vm267, %v372, 0.0
        %v374 = vrot.slane %v373, 4
        %v375 = vadd.f32 %v373, %v374
        %v376 = vrot.slane %v375, 2
        %v377 = vadd.f32 %v375, %v376
        %v378 = vrot.slane %v377, 1
        %v379 = vadd.f32 %v377, %v378
        %v380 = vsub.f32 %v255, %v379
        %v381 = vmul.f32 %v380, %v380
        %v382 = vmul.f32 %v371, %v381
        %v383 = vsel %vm267, %v382, 0.0
        %v384 = vrot.slane %v383, 4
        %v385 = vadd.f32 %v383, %v384
        %v386 = vrot.slane %v385, 2
        %v387 = vadd.f32 %v385, %v386
        %v388 = vrot.slane %v387, 1
        %v389 = vadd.f32 %v387, %v388
        %v390 = vadd.f32 %v389, 1e-12
        %v391 = vrsqrt.pop %v390
        %v392 = vmul.f32 %v390, %v391
        %vm393 = vcmp.eq.f32.partialorder %v390, inf
        %v394 = vsel %vm393, %v390, %v392
        %vm395 = vcmp.eq.f32.partialorder %v390, 0.0
        %v396 = vand.u32 %v390, 2147483648
        %v397 = vsel %vm395, %v396, %v394
        %vm398 = vcmask 253952
        %399 = vst.msk [vmem:[%s254] sm:$0x1] %vm398, %v379
        %401 = vrot.lane.b32.xlu0 %v397, 32
        %v402 = vpop.permute.xlu0 %401
        %vm404 = vcmask 516352
        %405 = vst.msk [vmem:[%s254] sm:$0x1] %vm404, %v402
        %s406 = sand.u32 %s142, 1
        %s407 = scalar_lea.sflag [#allocation5], %s406
        %s408 = sand.u32 %s142, 1
        %s409 = scalar_lea.vmem [#allocation8], %s408
        // Predicated region
        $region49: #{tpu_custom_call.1} parent=39 // pred_check
          %p410 = pneg %p152
        $region50: #{tpu_custom_call.1} parent=39 // pred_check_branch
          %412 = sbr.rel (%p410) target = $region52
        $region51: #{tpu_custom_call.1} parent=39 // pred_region
          %s414 = ssub.s32 16, 16
          %415 = vsyncadd %s407, %s414
          %s416 = smul.addr %s24, 16
          %s417 = scalar_lea.hbm %s5, %s416
          %s419 = sshll.u32 %s409, 4
          %s420 = int_to_ptr.vmem [resolvable:$true] %s419
          %422 = dma.vmem_to_hbm [thread:$0]  %s420, 16, %s417, %s407
        $region52: #{tpu_custom_call.1} parent=39 // pred_fallthru
          _
      $region40: #{tpu_custom_call.1} parent=5 // pred_fallthru
        _
      %p423 = scmp.le.s32.totalorder 2, %s19
      // Predicated region
      $region53: #{tpu_custom_call.1} parent=5 // pred_check
        %p424 = pneg %p423
      $region54: #{tpu_custom_call.1} parent=5 // pred_check_branch
        %426 = sbr.rel (%p424) target = $region56
      $region55: #{tpu_custom_call.1} parent=5 // pred_region
        %s427 = ssub.s32 %s19, 2
        // Predicated region
        $region57: #{tpu_custom_call.1} parent=55 // pred_check
          %p428 = pneg %p158
        $region58: #{tpu_custom_call.1} parent=55 // pred_check_branch
          %430 = sbr.rel (%p428) target = $region60
        $region59: #{tpu_custom_call.1} parent=55 // pred_region
          %s431 = sand.u32 %s143, 1
          %s432 = scalar_lea.sflag [#allocation5], %s431
          %s433 = sand.u32 %s143, 1
          %s434 = scalar_lea.vmem [#allocation8], %s433
          %435 = dma.done %s432, 16
        $region60: #{tpu_custom_call.1} parent=55 // pred_fallthru
          _
      $region56: #{tpu_custom_call.1} parent=5 // pred_fallthru
        _
    $region6: #{tpu_custom_call.1} parent=1 // loop_footer
      %s23 = sadd.s32 1, %s19
    $region7: #{tpu_custom_call.1} parent=1 // loop_footer_branch
      %18 = sbr.rel target = $region3
    $region8: #{tpu_custom_call.1} parent=1 // loop_exit
      _
    %436 = vsyncpa [#allocation4], 1
    %s437 = scalar_lea.sflag [#allocation4], 1
    %438 = vsyncpa %s437, 1
    %439 = vsyncpa [#allocation7], 1
    %440 = vsyncpa [#allocation5], 1
    %s441 = scalar_lea.sflag [#allocation5], 1
    %442 = vsyncpa %s441, 1

</llo_original>
